<compile_context>
chip_gen: v7x
topology: tpu7x:2x2x1
jax: 0.10.0
libtpu: 0.0.40
codegen_flags: <defaults>
</compile_context>

<pallas_src>
import jax
import jax.numpy as jnp
from jax.experimental import pallas as pl
from jax.experimental.pallas import tpu as pltpu

LANE = 128  # TPU lane width — output is padded to this for an unmasked store.


def qnetwork_kernel(x_ref, w1_ref, w2_ref, o_ref):
    # x_ref:  [B, S+1]     last column is ones  -> b1 folded into w1's last row
    # w1_ref: [S+1, H]     last row is b1
    # w2_ref: [H+1, LANE]  last row is b2, lanes >= A are zero
    # o_ref:  [B, LANE]    lane-dense; wrapper slices [:, :A]
    x = x_ref[...]
    w1 = w1_ref[...]
    w2 = w2_ref[...]

    B = x.shape[0]
    S1 = x.shape[1]          # S + 1
    H = w1.shape[1]

    # ---- fc1 (+ bias): unrolled VPU broadcast-MACs, no MXU ----------------
    h = x[:, 0:1] * w1[0:1, :]                       # [B,1] * [1,H] -> [B,H]
    for s in range(1, S1):
        h = h + x[:, s:s + 1] * w1[s:s + 1, :]
    h = jnp.tanh(h)                                  # EUP transcendental, fp32

    # ---- fc2 (+ bias): unrolled VPU MACs into a lane-dense [B, 128] tile --
    acc = jnp.broadcast_to(w2[H:H + 1, :], (B, w2.shape[1]))   # bias row b2
    for j in range(H):
        acc = acc + h[:, j:j + 1] * w2[j:j + 1, :]

    o_ref[...] = acc.astype(o_ref.dtype)             # unmasked full-tile store


@jax.jit
def qnetwork_forward(x, w1, b1, w2, b2):
    """x: [B,S]; w1: [S,H]; b1: [1,H]; w2: [H,A]; b2: [1,A] -> [B,A]."""
    B, S = x.shape
    H = w1.shape[1]
    A = w2.shape[1]

    # Fold biases into the weight operands (wrapper-side layout plumbing).
    x_aug = jnp.concatenate([x, jnp.ones((B, 1), x.dtype)], axis=1)     # [B,S+1]
    w1_aug = jnp.concatenate([w1, b1.reshape(1, H)], axis=0)            # [S+1,H]
    w2_aug = jnp.concatenate([w2, b2.reshape(1, A)], axis=0)            # [H+1,A]
    # Zero-pad fc2 weights to 128 lanes -> lane-dense kernel output.
    w2_pad = jnp.zeros((H + 1, LANE), w2.dtype).at[:, :A].set(w2_aug)   # [H+1,128]

    out_pad = pl.pallas_call(
        qnetwork_kernel,
        out_shape=jax.ShapeDtypeStruct((B, LANE), jnp.float32),
        in_specs=[
            pl.BlockSpec(memory_space=pltpu.MemorySpace.VMEM),
            pl.BlockSpec(memory_space=pltpu.MemorySpace.VMEM),
            pl.BlockSpec(memory_space=pltpu.MemorySpace.VMEM),
        ],
        out_specs=pl.BlockSpec(memory_space=pltpu.MemorySpace.VMEM),
    )(x_aug, w1_aug, w2_pad)

    return out_pad[:, :A]


if __name__ == "__main__":
    # CartPole-like sizes: state_size=4, hidden_size=16, action_size=2
    state_size, hidden_size, action_size = 4, 16, 2
    batch = 8

    key = jax.random.PRNGKey(0)
    kx, kw1, kb1, kw2, kb2 = jax.random.split(key, 5)

    # weight.data.normal_(0, 0.1) as in the PyTorch __init__ (weights stored
    # transposed vs nn.Linear's [out, in]; biases as [1, out] rows).
    w1 = 0.1 * jax.random.normal(kw1, (state_size, hidden_size), jnp.float32)
    b1 = 0.1 * jax.random.normal(kb1, (1, hidden_size), jnp.float32)
    w2 = 0.1 * jax.random.normal(kw2, (hidden_size, action_size), jnp.float32)
    b2 = 0.1 * jax.random.normal(kb2, (1, action_size), jnp.float32)

    x = jax.random.normal(kx, (batch, state_size), jnp.float32)

    out = qnetwork_forward(x, w1, b1, w2, b2)
    out = jax.block_until_ready(out)

    # Reference check in plain JAX
    ref = jnp.tanh(x @ w1 + b1) @ w2 + b2
    assert out.shape == (batch, action_size)
    assert jnp.allclose(out, ref, atol=1e-5, rtol=1e-5)

    print("KERNEL_OK")
</pallas_src>

<mosaic_0001>
module attributes {stable_mosaic.version = 11 : i64} {
  func.func @qnetwork_kernel(%arg0: memref<8x5xf32, #tpu.memory_space<vmem>>, %arg1: memref<5x16xf32, #tpu.memory_space<vmem>>, %arg2: memref<17x128xf32, #tpu.memory_space<vmem>>, %arg3: memref<8x128xf32, #tpu.memory_space<vmem>>) attributes {dimension_semantics = [], scalar_prefetch = 0 : i64, scratch_operands = 0 : i64, tpu.core_type = #tpu.core_type<tc>} {
    %c0 = arith.constant 0 : index
    %c0_0 = arith.constant 0 : index
    %0 = vector.load %arg0[%c0, %c0_0] : memref<8x5xf32, #tpu.memory_space<vmem>>, vector<8x5xf32>
    %c0_1 = arith.constant 0 : index
    %c0_2 = arith.constant 0 : index
    %1 = vector.load %arg1[%c0_1, %c0_2] : memref<5x16xf32, #tpu.memory_space<vmem>>, vector<5x16xf32>
    %c0_3 = arith.constant 0 : index
    %c0_4 = arith.constant 0 : index
    %2 = vector.load %arg2[%c0_3, %c0_4] : memref<17x128xf32, #tpu.memory_space<vmem>>, vector<17x128xf32>
    %3 = vector.extract_strided_slice %0 {offsets = [0, 0], sizes = [8, 1], strides = [1, 1]} : vector<8x5xf32> to vector<8x1xf32>
    %4 = vector.extract_strided_slice %1 {offsets = [0, 0], sizes = [1, 16], strides = [1, 1]} : vector<5x16xf32> to vector<1x16xf32>
    %5 = vector.broadcast %3 : vector<8x1xf32> to vector<8x16xf32>
    %6 = vector.broadcast %4 : vector<1x16xf32> to vector<8x16xf32>
    %7 = arith.mulf %5, %6 : vector<8x16xf32>
    %8 = vector.extract_strided_slice %0 {offsets = [0, 1], sizes = [8, 1], strides = [1, 1]} : vector<8x5xf32> to vector<8x1xf32>
    %9 = vector.extract_strided_slice %1 {offsets = [1, 0], sizes = [1, 16], strides = [1, 1]} : vector<5x16xf32> to vector<1x16xf32>
    %10 = vector.broadcast %8 : vector<8x1xf32> to vector<8x16xf32>
    %11 = vector.broadcast %9 : vector<1x16xf32> to vector<8x16xf32>
    %12 = arith.mulf %10, %11 : vector<8x16xf32>
    %13 = arith.addf %7, %12 : vector<8x16xf32>
    %14 = vector.extract_strided_slice %0 {offsets = [0, 2], sizes = [8, 1], strides = [1, 1]} : vector<8x5xf32> to vector<8x1xf32>
    %15 = vector.extract_strided_slice %1 {offsets = [2, 0], sizes = [1, 16], strides = [1, 1]} : vector<5x16xf32> to vector<1x16xf32>
    %16 = vector.broadcast %14 : vector<8x1xf32> to vector<8x16xf32>
    %17 = vector.broadcast %15 : vector<1x16xf32> to vector<8x16xf32>
    %18 = arith.mulf %16, %17 : vector<8x16xf32>
    %19 = arith.addf %13, %18 : vector<8x16xf32>
    %20 = vector.extract_strided_slice %0 {offsets = [0, 3], sizes = [8, 1], strides = [1, 1]} : vector<8x5xf32> to vector<8x1xf32>
    %21 = vector.extract_strided_slice %1 {offsets = [3, 0], sizes = [1, 16], strides = [1, 1]} : vector<5x16xf32> to vector<1x16xf32>
    %22 = vector.broadcast %20 : vector<8x1xf32> to vector<8x16xf32>
    %23 = vector.broadcast %21 : vector<1x16xf32> to vector<8x16xf32>
    %24 = arith.mulf %22, %23 : vector<8x16xf32>
    %25 = arith.addf %19, %24 : vector<8x16xf32>
    %26 = vector.extract_strided_slice %0 {offsets = [0, 4], sizes = [8, 1], strides = [1, 1]} : vector<8x5xf32> to vector<8x1xf32>
    %27 = vector.extract_strided_slice %1 {offsets = [4, 0], sizes = [1, 16], strides = [1, 1]} : vector<5x16xf32> to vector<1x16xf32>
    %28 = vector.broadcast %26 : vector<8x1xf32> to vector<8x16xf32>
    %29 = vector.broadcast %27 : vector<1x16xf32> to vector<8x16xf32>
    %30 = arith.mulf %28, %29 : vector<8x16xf32>
    %31 = arith.addf %25, %30 : vector<8x16xf32>
    %32 = math.tanh %31 : vector<8x16xf32>
    %33 = vector.extract_strided_slice %2 {offsets = [16, 0], sizes = [1, 128], strides = [1, 1]} : vector<17x128xf32> to vector<1x128xf32>
    %34 = vector.shape_cast %33 : vector<1x128xf32> to vector<1x128xf32>
    %35 = vector.broadcast %34 : vector<1x128xf32> to vector<8x128xf32>
    %36 = vector.extract_strided_slice %32 {offsets = [0, 0], sizes = [8, 1], strides = [1, 1]} : vector<8x16xf32> to vector<8x1xf32>
    %37 = vector.extract_strided_slice %2 {offsets = [0, 0], sizes = [1, 128], strides = [1, 1]} : vector<17x128xf32> to vector<1x128xf32>
    %38 = vector.broadcast %36 : vector<8x1xf32> to vector<8x128xf32>
    %39 = vector.broadcast %37 : vector<1x128xf32> to vector<8x128xf32>
    %40 = arith.mulf %38, %39 : vector<8x128xf32>
    %41 = arith.addf %35, %40 : vector<8x128xf32>
    %42 = vector.extract_strided_slice %32 {offsets = [0, 1], sizes = [8, 1], strides = [1, 1]} : vector<8x16xf32> to vector<8x1xf32>
    %43 = vector.extract_strided_slice %2 {offsets = [1, 0], sizes = [1, 128], strides = [1, 1]} : vector<17x128xf32> to vector<1x128xf32>
    %44 = vector.broadcast %42 : vector<8x1xf32> to vector<8x128xf32>
    %45 = vector.broadcast %43 : vector<1x128xf32> to vector<8x128xf32>
    %46 = arith.mulf %44, %45 : vector<8x128xf32>
    %47 = arith.addf %41, %46 : vector<8x128xf32>
    %48 = vector.extract_strided_slice %32 {offsets = [0, 2], sizes = [8, 1], strides = [1, 1]} : vector<8x16xf32> to vector<8x1xf32>
    %49 = vector.extract_strided_slice %2 {offsets = [2, 0], sizes = [1, 128], strides = [1, 1]} : vector<17x128xf32> to vector<1x128xf32>
    %50 = vector.broadcast %48 : vector<8x1xf32> to vector<8x128xf32>
    %51 = vector.broadcast %49 : vector<1x128xf32> to vector<8x128xf32>
    %52 = arith.mulf %50, %51 : vector<8x128xf32>
    %53 = arith.addf %47, %52 : vector<8x128xf32>
    %54 = vector.extract_strided_slice %32 {offsets = [0, 3], sizes = [8, 1], strides = [1, 1]} : vector<8x16xf32> to vector<8x1xf32>
    %55 = vector.extract_strided_slice %2 {offsets = [3, 0], sizes = [1, 128], strides = [1, 1]} : vector<17x128xf32> to vector<1x128xf32>
    %56 = vector.broadcast %54 : vector<8x1xf32> to vector<8x128xf32>
    %57 = vector.broadcast %55 : vector<1x128xf32> to vector<8x128xf32>
    %58 = arith.mulf %56, %57 : vector<8x128xf32>
    %59 = arith.addf %53, %58 : vector<8x128xf32>
    %60 = vector.extract_strided_slice %32 {offsets = [0, 4], sizes = [8, 1], strides = [1, 1]} : vector<8x16xf32> to vector<8x1xf32>
    %61 = vector.extract_strided_slice %2 {offsets = [4, 0], sizes = [1, 128], strides = [1, 1]} : vector<17x128xf32> to vector<1x128xf32>
    %62 = vector.broadcast %60 : vector<8x1xf32> to vector<8x128xf32>
    %63 = vector.broadcast %61 : vector<1x128xf32> to vector<8x128xf32>
    %64 = arith.mulf %62, %63 : vector<8x128xf32>
    %65 = arith.addf %59, %64 : vector<8x128xf32>
    %66 = vector.extract_strided_slice %32 {offsets = [0, 5], sizes = [8, 1], strides = [1, 1]} : vector<8x16xf32> to vector<8x1xf32>
    %67 = vector.extract_strided_slice %2 {offsets = [5, 0], sizes = [1, 128], strides = [1, 1]} : vector<17x128xf32> to vector<1x128xf32>
    %68 = vector.broadcast %66 : vector<8x1xf32> to vector<8x128xf32>
    %69 = vector.broadcast %67 : vector<1x128xf32> to vector<8x128xf32>
    %70 = arith.mulf %68, %69 : vector<8x128xf32>
    %71 = arith.addf %65, %70 : vector<8x128xf32>
    %72 = vector.extract_strided_slice %32 {offsets = [0, 6], sizes = [8, 1], strides = [1, 1]} : vector<8x16xf32> to vector<8x1xf32>
    %73 = vector.extract_strided_slice %2 {offsets = [6, 0], sizes = [1, 128], strides = [1, 1]} : vector<17x128xf32> to vector<1x128xf32>
    %74 = vector.broadcast %72 : vector<8x1xf32> to vector<8x128xf32>
    %75 = vector.broadcast %73 : vector<1x128xf32> to vector<8x128xf32>
    %76 = arith.mulf %74, %75 : vector<8x128xf32>
    %77 = arith.addf %71, %76 : vector<8x128xf32>
    %78 = vector.extract_strided_slice %32 {offsets = [0, 7], sizes = [8, 1], strides = [1, 1]} : vector<8x16xf32> to vector<8x1xf32>
    %79 = vector.extract_strided_slice %2 {offsets = [7, 0], sizes = [1, 128], strides = [1, 1]} : vector<17x128xf32> to vector<1x128xf32>
    %80 = vector.broadcast %78 : vector<8x1xf32> to vector<8x128xf32>
    %81 = vector.broadcast %79 : vector<1x128xf32> to vector<8x128xf32>
    %82 = arith.mulf %80, %81 : vector<8x128xf32>
    %83 = arith.addf %77, %82 : vector<8x128xf32>
    %84 = vector.extract_strided_slice %32 {offsets = [0, 8], sizes = [8, 1], strides = [1, 1]} : vector<8x16xf32> to vector<8x1xf32>
    %85 = vector.extract_strided_slice %2 {offsets = [8, 0], sizes = [1, 128], strides = [1, 1]} : vector<17x128xf32> to vector<1x128xf32>
    %86 = vector.broadcast %84 : vector<8x1xf32> to vector<8x128xf32>
    %87 = vector.broadcast %85 : vector<1x128xf32> to vector<8x128xf32>
    %88 = arith.mulf %86, %87 : vector<8x128xf32>
    %89 = arith.addf %83, %88 : vector<8x128xf32>
    %90 = vector.extract_strided_slice %32 {offsets = [0, 9], sizes = [8, 1], strides = [1, 1]} : vector<8x16xf32> to vector<8x1xf32>
    %91 = vector.extract_strided_slice %2 {offsets = [9, 0], sizes = [1, 128], strides = [1, 1]} : vector<17x128xf32> to vector<1x128xf32>
    %92 = vector.broadcast %90 : vector<8x1xf32> to vector<8x128xf32>
    %93 = vector.broadcast %91 : vector<1x128xf32> to vector<8x128xf32>
    %94 = arith.mulf %92, %93 : vector<8x128xf32>
    %95 = arith.addf %89, %94 : vector<8x128xf32>
    %96 = vector.extract_strided_slice %32 {offsets = [0, 10], sizes = [8, 1], strides = [1, 1]} : vector<8x16xf32> to vector<8x1xf32>
    %97 = vector.extract_strided_slice %2 {offsets = [10, 0], sizes = [1, 128], strides = [1, 1]} : vector<17x128xf32> to vector<1x128xf32>
    %98 = vector.broadcast %96 : vector<8x1xf32> to vector<8x128xf32>
    %99 = vector.broadcast %97 : vector<1x128xf32> to vector<8x128xf32>
    %100 = arith.mulf %98, %99 : vector<8x128xf32>
    %101 = arith.addf %95, %100 : vector<8x128xf32>
    %102 = vector.extract_strided_slice %32 {offsets = [0, 11], sizes = [8, 1], strides = [1, 1]} : vector<8x16xf32> to vector<8x1xf32>
    %103 = vector.extract_strided_slice %2 {offsets = [11, 0], sizes = [1, 128], strides = [1, 1]} : vector<17x128xf32> to vector<1x128xf32>
    %104 = vector.broadcast %102 : vector<8x1xf32> to vector<8x128xf32>
    %105 = vector.broadcast %103 : vector<1x128xf32> to vector<8x128xf32>
    %106 = arith.mulf %104, %105 : vector<8x128xf32>
    %107 = arith.addf %101, %106 : vector<8x128xf32>
    %108 = vector.extract_strided_slice %32 {offsets = [0, 12], sizes = [8, 1], strides = [1, 1]} : vector<8x16xf32> to vector<8x1xf32>
    %109 = vector.extract_strided_slice %2 {offsets = [12, 0], sizes = [1, 128], strides = [1, 1]} : vector<17x128xf32> to vector<1x128xf32>
    %110 = vector.broadcast %108 : vector<8x1xf32> to vector<8x128xf32>
    %111 = vector.broadcast %109 : vector<1x128xf32> to vector<8x128xf32>
    %112 = arith.mulf %110, %111 : vector<8x128xf32>
    %113 = arith.addf %107, %112 : vector<8x128xf32>
    %114 = vector.extract_strided_slice %32 {offsets = [0, 13], sizes = [8, 1], strides = [1, 1]} : vector<8x16xf32> to vector<8x1xf32>
    %115 = vector.extract_strided_slice %2 {offsets = [13, 0], sizes = [1, 128], strides = [1, 1]} : vector<17x128xf32> to vector<1x128xf32>
    %116 = vector.broadcast %114 : vector<8x1xf32> to vector<8x128xf32>
    %117 = vector.broadcast %115 : vector<1x128xf32> to vector<8x128xf32>
    %118 = arith.mulf %116, %117 : vector<8x128xf32>
    %119 = arith.addf %113, %118 : vector<8x128xf32>
    %120 = vector.extract_strided_slice %32 {offsets = [0, 14], sizes = [8, 1], strides = [1, 1]} : vector<8x16xf32> to vector<8x1xf32>
    %121 = vector.extract_strided_slice %2 {offsets = [14, 0], sizes = [1, 128], strides = [1, 1]} : vector<17x128xf32> to vector<1x128xf32>
    %122 = vector.broadcast %120 : vector<8x1xf32> to vector<8x128xf32>
    %123 = vector.broadcast %121 : vector<1x128xf32> to vector<8x128xf32>
    %124 = arith.mulf %122, %123 : vector<8x128xf32>
    %125 = arith.addf %119, %124 : vector<8x128xf32>
    %126 = vector.extract_strided_slice %32 {offsets = [0, 15], sizes = [8, 1], strides = [1, 1]} : vector<8x16xf32> to vector<8x1xf32>
    %127 = vector.extract_strided_slice %2 {offsets = [15, 0], sizes = [1, 128], strides = [1, 1]} : vector<17x128xf32> to vector<1x128xf32>
    %128 = vector.broadcast %126 : vector<8x1xf32> to vector<8x128xf32>
    %129 = vector.broadcast %127 : vector<1x128xf32> to vector<8x128xf32>
    %130 = arith.mulf %128, %129 : vector<8x128xf32>
    %131 = arith.addf %125, %130 : vector<8x128xf32>
    %c0_5 = arith.constant 0 : index
    %c0_6 = arith.constant 0 : index
    %132 = vector.load %arg3[%c0_5, %c0_6] : memref<8x128xf32, #tpu.memory_space<vmem>>, vector<8x128xf32>
    tpu.vector_store %arg3[%c0_5, %c0_6], %131 {strides = array<i32>} : memref<8x128xf32, #tpu.memory_space<vmem>>, vector<8x128xf32>,
    return
  }
}

</mosaic_0001>

<llo_original>
// kernel: qnetwork_forward.1
$region0: #{qnetwork_forward.1}
  #allocation0 [shape = 'u32[]', space=smem, size = 0x4, offset = 0x4, fixed_abs, tag = 'smem constant byte address 0x4 - core index']
  #allocation1 [shape = 'u32[144,128]{1,0:T(1,128)}', space=vmem, size = 0x12000, scoped, tag = 'internal scratch']
  %s0 = inlined_call_operand.vmem [shape: f32[8,5], index: 0, kind: input, shape index: {}]
  %s1 = inlined_call_operand.vmem [shape: f32[5,16], index: 1, kind: input, shape index: {}]
  %s2 = inlined_call_operand.vmem [shape: f32[17,128], index: 2, kind: input, shape index: {}]
  %s3 = inlined_call_operand.vmem [shape: f32[8,128], index: 3, kind: output, shape index: {}]
  %s4 = sld [smem:[#allocation0]]
  $region22: #{qnetwork_forward.1} parent=0
    _
  %s6 = ssub.s32 1, %s4
  %s7 = scalar_select 0, %s6, %s4
  // Predicated region
  $region2: #{qnetwork_forward.1} parent=0 // pred_check
    _
  $region3: #{qnetwork_forward.1} parent=0 // pred_check_branch
    %9 = sbr.rel (0) target = $region5
  $region4: #{qnetwork_forward.1} parent=0 // pred_region
    _
  $region5: #{qnetwork_forward.1} parent=0 // pred_fallthru
    _
  // Predicated region
  $region6: #{qnetwork_forward.1} parent=0 // pred_check
    _
  $region7: #{qnetwork_forward.1} parent=0 // pred_check_branch
    %11 = sbr.rel (0) target = $region9
  $region8: #{qnetwork_forward.1} parent=0 // pred_region
    _
  $region9: #{qnetwork_forward.1} parent=0 // pred_fallthru
    _
  // Predicated region
  $region10: #{qnetwork_forward.1} parent=0 // pred_check
    _
  $region11: #{qnetwork_forward.1} parent=0 // pred_check_branch
    %13 = sbr.rel (0) target = $region13
  $region12: #{qnetwork_forward.1} parent=0 // pred_region
    _
  $region13: #{qnetwork_forward.1} parent=0 // pred_fallthru
    _
  %v14 = vld [vmem:[%s0] sm:$0xff]
  %v15 = vld [vmem:[%s1] sm:$0x1f]
  %v16 = vld [vmem:[%s2] sm:$0xff]
  %v17 = vld [vmem:[%s2 + $0x8] sm:$0xff]
  %v18 = vld [vmem:[%s2 + $0x10] sm:$0x1]
  %20 = vset.pattern.permute.xlu0 0
  %21 = vperm.xlu0 %20, %v14
  %v22 = vpop.permute.xlu0 %21
  %v24 = vlaneseq
  %v25 = vshrl.u32 %v24, 7
  %v26 = vsub.s32 0, %v25
  %v27 = vrot.slane %v15, %v26
  %v28 = vmul.f32 %v22, %v27
  %29 = vset.pattern.permute.xlu0 1
  %30 = vperm.xlu0 %29, %v14
  %v31 = vpop.permute.xlu0 %30
  %v33 = vlaneseq
  %v34 = vshrl.u32 %v33, 7
  %v35 = vsub.s32 1, %v34
  %v36 = vrot.slane %v15, %v35
  %v37 = vmul.f32 %v31, %v36
  %v38 = vadd.f32 %v28, %v37
  %39 = vset.pattern.permute.xlu0 2
  %40 = vperm.xlu0 %39, %v14
  %v41 = vpop.permute.xlu0 %40
  %v43 = vlaneseq
  %v44 = vshrl.u32 %v43, 7
  %v45 = vsub.s32 2, %v44
  %v46 = vrot.slane %v15, %v45
  %v47 = vmul.f32 %v41, %v46
  %v48 = vadd.f32 %v38, %v47
  %49 = vset.pattern.permute.xlu0 3
  %50 = vperm.xlu0 %49, %v14
  %v51 = vpop.permute.xlu0 %50
  %v53 = vlaneseq
  %v54 = vshrl.u32 %v53, 7
  %v55 = vsub.s32 3, %v54
  %v56 = vrot.slane %v15, %v55
  %v57 = vmul.f32 %v51, %v56
  %v58 = vadd.f32 %v48, %v57
  %59 = vset.pattern.permute.xlu0 4
  %60 = vperm.xlu0 %59, %v14
  %v61 = vpop.permute.xlu0 %60
  %v63 = vlaneseq
  %v64 = vshrl.u32 %v63, 7
  %v65 = vsub.s32 4, %v64
  %v66 = vrot.slane %v15, %v65
  %v67 = vmul.f32 %v61, %v66
  %v68 = vadd.f32 %v58, %v67
  %v69 = vtanh.pop %v68
  %v70 = vlaneseq
  %v71 = vshrl.u32 %v70, 7
  %v72 = vsub.s32 0, %v71
  %v73 = vrot.slane %v18, %v72
  %75 = vset.pattern.permute.xlu0 0
  %76 = vperm.xlu0 %75, %v69
  %v77 = vpop.permute.xlu0 %76
  %v79 = vlaneseq
  %v80 = vshrl.u32 %v79, 7
  %v81 = vsub.s32 0, %v80
  %v82 = vrot.slane %v16, %v81
  %v83 = vmul.f32 %v77, %v82
  %v84 = vadd.f32 %v73, %v83
  %85 = vset.pattern.permute.xlu0 1
  %86 = vperm.xlu0 %85, %v69
  %v87 = vpop.permute.xlu0 %86
  %v89 = vlaneseq
  %v90 = vshrl.u32 %v89, 7
  %v91 = vsub.s32 1, %v90
  %v92 = vrot.slane %v16, %v91
  %v93 = vmul.f32 %v87, %v92
  %v94 = vadd.f32 %v84, %v93
  %95 = vset.pattern.permute.xlu0 2
  %96 = vperm.xlu0 %95, %v69
  %v97 = vpop.permute.xlu0 %96
  %v99 = vlaneseq
  %v100 = vshrl.u32 %v99, 7
  %v101 = vsub.s32 2, %v100
  %v102 = vrot.slane %v16, %v101
  %v103 = vmul.f32 %v97, %v102
  %v104 = vadd.f32 %v94, %v103
  %105 = vset.pattern.permute.xlu0 3
  %106 = vperm.xlu0 %105, %v69
  %v107 = vpop.permute.xlu0 %106
  %v109 = vlaneseq
  %v110 = vshrl.u32 %v109, 7
  %v111 = vsub.s32 3, %v110
  %v112 = vrot.slane %v16, %v111
  %v113 = vmul.f32 %v107, %v112
  %v114 = vadd.f32 %v104, %v113
  %115 = vset.pattern.permute.xlu0 4
  %116 = vperm.xlu0 %115, %v69
  %v117 = vpop.permute.xlu0 %116
  %v119 = vlaneseq
  %v120 = vshrl.u32 %v119, 7
  %v121 = vsub.s32 4, %v120
  %v122 = vrot.slane %v16, %v121
  %v123 = vmul.f32 %v117, %v122
  %v124 = vadd.f32 %v114, %v123
  %125 = vset.pattern.permute.xlu0 5
  %126 = vperm.xlu0 %125, %v69
  %v127 = vpop.permute.xlu0 %126
  %v129 = vlaneseq
  %v130 = vshrl.u32 %v129, 7
  %v131 = vsub.s32 5, %v130
  %v132 = vrot.slane %v16, %v131
  %v133 = vmul.f32 %v127, %v132
  %v134 = vadd.f32 %v124, %v133
  %135 = vset.pattern.permute.xlu0 6
  %136 = vperm.xlu0 %135, %v69
  %v137 = vpop.permute.xlu0 %136
  %v139 = vlaneseq
  %v140 = vshrl.u32 %v139, 7
  %v141 = vsub.s32 6, %v140
  %v142 = vrot.slane %v16, %v141
  %v143 = vmul.f32 %v137, %v142
  %v144 = vadd.f32 %v134, %v143
  %145 = vset.pattern.permute.xlu0 7
  %146 = vperm.xlu0 %145, %v69
  %v147 = vpop.permute.xlu0 %146
  %v149 = vlaneseq
  %v150 = vshrl.u32 %v149, 7
  %v151 = vsub.s32 7, %v150
  %v152 = vrot.slane %v16, %v151
  %v153 = vmul.f32 %v147, %v152
  %v154 = vadd.f32 %v144, %v153
  %155 = vset.pattern.permute.xlu0 8
  %156 = vperm.xlu0 %155, %v69
  %v157 = vpop.permute.xlu0 %156
  %v159 = vlaneseq
  %v160 = vshrl.u32 %v159, 7
  %v161 = vsub.s32 0, %v160
  %v162 = vrot.slane %v17, %v161
  %v163 = vmul.f32 %v157, %v162
  %v164 = vadd.f32 %v154, %v163
  %165 = vset.pattern.permute.xlu0 9
  %166 = vperm.xlu0 %165, %v69
  %v167 = vpop.permute.xlu0 %166
  %v169 = vlaneseq
  %v170 = vshrl.u32 %v169, 7
  %v171 = vsub.s32 1, %v170
  %v172 = vrot.slane %v17, %v171
  %v173 = vmul.f32 %v167, %v172
  %v174 = vadd.f32 %v164, %v173
  %175 = vset.pattern.permute.xlu0 10
  %176 = vperm.xlu0 %175, %v69
  %v177 = vpop.permute.xlu0 %176
  %v179 = vlaneseq
  %v180 = vshrl.u32 %v179, 7
  %v181 = vsub.s32 2, %v180
  %v182 = vrot.slane %v17, %v181
  %v183 = vmul.f32 %v177, %v182
  %v184 = vadd.f32 %v174, %v183
  %185 = vset.pattern.permute.xlu0 11
  %186 = vperm.xlu0 %185, %v69
  %v187 = vpop.permute.xlu0 %186
  %v189 = vlaneseq
  %v190 = vshrl.u32 %v189, 7
  %v191 = vsub.s32 3, %v190
  %v192 = vrot.slane %v17, %v191
  %v193 = vmul.f32 %v187, %v192
  %v194 = vadd.f32 %v184, %v193
  %195 = vset.pattern.permute.xlu0 12
  %196 = vperm.xlu0 %195, %v69
  %v197 = vpop.permute.xlu0 %196
  %v199 = vlaneseq
  %v200 = vshrl.u32 %v199, 7
  %v201 = vsub.s32 4, %v200
  %v202 = vrot.slane %v17, %v201
  %v203 = vmul.f32 %v197, %v202
  %v204 = vadd.f32 %v194, %v203
  %205 = vset.pattern.permute.xlu0 13
  %206 = vperm.xlu0 %205, %v69
  %v207 = vpop.permute.xlu0 %206
  %v209 = vlaneseq
  %v210 = vshrl.u32 %v209, 7
  %v211 = vsub.s32 5, %v210
  %v212 = vrot.slane %v17, %v211
  %v213 = vmul.f32 %v207, %v212
  %v214 = vadd.f32 %v204, %v213
  %215 = vset.pattern.permute.xlu0 14
  %216 = vperm.xlu0 %215, %v69
  %v217 = vpop.permute.xlu0 %216
  %v219 = vlaneseq
  %v220 = vshrl.u32 %v219, 7
  %v221 = vsub.s32 6, %v220
  %v222 = vrot.slane %v17, %v221
  %v223 = vmul.f32 %v217, %v222
  %v224 = vadd.f32 %v214, %v223
  %225 = vset.pattern.permute.xlu0 15
  %226 = vperm.xlu0 %225, %v69
  %v227 = vpop.permute.xlu0 %226
  %v229 = vlaneseq
  %v230 = vshrl.u32 %v229, 7
  %v231 = vsub.s32 7, %v230
  %v232 = vrot.slane %v17, %v231
  %v233 = vmul.f32 %v227, %v232
  %v234 = vadd.f32 %v224, %v233
  %235 = vst [vmem:[%s3] sm:$0xff] %v234
  // Predicated region
  $region14: #{qnetwork_forward.1} parent=0 // pred_check
    _
  $region15: #{qnetwork_forward.1} parent=0 // pred_check_branch
    %237 = sbr.rel (0) target = $region17
  $region16: #{qnetwork_forward.1} parent=0 // pred_region
    _
  $region17: #{qnetwork_forward.1} parent=0 // pred_fallthru
    _
  // Predicated region
  $region18: #{qnetwork_forward.1} parent=0 // pred_check
    _
  $region19: #{qnetwork_forward.1} parent=0 // pred_check_branch
    %239 = sbr.rel (0) target = $region21
  $region20: #{qnetwork_forward.1} parent=0 // pred_region
    _
  $region21: #{qnetwork_forward.1} parent=0 // pred_fallthru
    _

</llo_original>
